<compile_context>
chip_gen: v7x
topology: tpu7x:2x2x1
jax: 0.10.0
libtpu: 0.0.40
codegen_flags: <defaults>
</compile_context>

<pallas_src>
from itertools import combinations

import numpy as np
import jax
import jax.numpy as jnp
from jax.experimental import pallas as pl
from jax.experimental.pallas import tpu as pltpu

CONVEX_K = 10  # fixed in the reference module


# --------------------------------------------------------------------------- #
# Kernel
# --------------------------------------------------------------------------- #
def _loss_kernel(xyz_t_ref, skel_ref, skel_t_ref, pair_ref, nv_ref,
                 cd_ref, conv_ref):
    x = xyz_t_ref[0]      # (3, N)  point-cloud coords, lane-dense along points
    sc = skel_ref[0]      # (S, 3)  skeleton coords as sublane columns
    sr = skel_t_ref[0]    # (3, S)  skeleton coords as lane rows

    # ---- bidirectional closest-distance (chamfer-style) term --------------
    # d2[s, n] = ||skel_s - xyz_n||^2, built coordinate-by-coordinate on the
    # VPU (3 sub + 3 mul + 2 add over one (S, N) slab).  Non-negative by
    # construction, so no clamp is needed.
    d2 = None
    for c in range(3):
        diff = sc[:, c:c + 1] - x[c:c + 1, :]        # (S,1)-(1,N) -> (S,N)
        sq = diff * diff
        d2 = sq if d2 is None else d2 + sq

    # sqrt only after the (monotone) min: N + S sqrts instead of N*S.
    min_over_skel = jnp.min(d2, axis=0, keepdims=True)     # (1, N) per point
    min_over_pts = jnp.min(d2, axis=1, keepdims=True)      # (S, 1) per skel pt
    cd_part = (jnp.sum(jnp.sqrt(min_over_skel), axis=1, keepdims=True) +
               jnp.sum(jnp.sqrt(min_over_pts), axis=0, keepdims=True))  # (1,1)
    cd_ref[0] = cd_part

    # ---- convex-hull interior-point term -----------------------------------
    # sd2[l, k] = ||skel_l - skel_k||^2 (symmetric), same VPU expansion.
    sd2 = None
    for c in range(3):
        diff = sc[:, c:c + 1] - sr[c:c + 1, :]       # (S,1)-(1,S) -> (S,S)
        sq = diff * diff
        sd2 = sq if sd2 is None else sd2 + sq

    # pair_ref[l, k] == 1  iff  l is a hull vertex of the same class as k
    # (precomputed on the host, loop-invariant class structure folded in).
    mask = pair_ref[0]                                       # (S, S)
    masked = jnp.where(mask > 0.5, sd2, jnp.float32(1e30))
    mind = jnp.minimum(jnp.float32(1e5),
                       jnp.min(masked, axis=0, keepdims=True))  # (1, S)
    nv = nv_ref[0]                                           # (1, S): k not a vertex
    conv_ref[0] = jnp.sum(mind * nv, axis=1, keepdims=True)  # (1, 1)


def _loss_pallas(xyz_t, skel, skel_t, pair_mask, nonvertex):
    B, _, N = xyz_t.shape
    S = skel.shape[1]
    cd, conv = pl.pallas_call(
        _loss_kernel,
        out_shape=(jax.ShapeDtypeStruct((B, 1, 1), jnp.float32),
                   jax.ShapeDtypeStruct((B, 1, 1), jnp.float32)),
        grid_spec=pltpu.PrefetchScalarGridSpec(
            num_scalar_prefetch=0,
            grid=(B,),
            in_specs=[
                pl.BlockSpec((1, 3, N), lambda b: (b, 0, 0)),  # xyz_t
                pl.BlockSpec((1, S, 3), lambda b: (b, 0, 0)),  # skel
                pl.BlockSpec((1, 3, S), lambda b: (b, 0, 0)),  # skel_t
                pl.BlockSpec((1, S, S), lambda b: (b, 0, 0)),  # pair mask
                pl.BlockSpec((1, 1, S), lambda b: (b, 0, 0)),  # non-vertex wt
            ],
            out_specs=(pl.BlockSpec((1, 1, 1), lambda b: (b, 0, 0)),
                       pl.BlockSpec((1, 1, 1), lambda b: (b, 0, 0))),
        ),
        compiler_params=pltpu.CompilerParams(
            dimension_semantics=("parallel",)),
    )(xyz_t, skel, skel_t, pair_mask, nonvertex)
    return cd, conv


# --------------------------------------------------------------------------- #
# Host-side convex-hull vertex labelling (qhull replacement), vectorized
# --------------------------------------------------------------------------- #
def _hull_vertex_labels_batched(groups):
    """groups: (G, K, 3) numpy. Returns (G, K) float32: 1.0 for hull vertices.

    Caratheodory test: point k is NOT a hull vertex iff it lies inside some
    non-degenerate tetrahedron formed by 4 of the other points. Vectorized
    over (group, point, tetrahedron) with batched 3x3 solves."""
    G, K, _ = groups.shape
    others_idx = np.stack(
        [np.concatenate([np.arange(0, k), np.arange(k + 1, K)]) for k in range(K)],
        axis=0)                                                   # (K, K-1)
    combos = np.array(list(combinations(range(K - 1), 4)), dtype=np.int64)  # (C,4)
    tet_idx = others_idx[:, combos]                               # (K, C, 4)

    T = groups[:, tet_idx, :]                                     # (G, K, C, 4, 3)
    base = T[..., 0, :]                                           # (G, K, C, 3)
    M = np.swapaxes(T[..., 1:, :] - base[..., None, :], -1, -2)   # (G, K, C, 3, 3)
    rhs = groups[:, :, None, :] - base                            # (G, K, C, 3)

    dets = np.linalg.det(M)                                       # (G, K, C)
    nondeg = np.abs(dets) > 1e-12
    M_safe = np.where(nondeg[..., None, None], M,
                      np.eye(3, dtype=M.dtype))
    lam = np.linalg.solve(M_safe, rhs[..., None])[..., 0]         # (G, K, C, 3)
    inside_tet = (nondeg
                  & np.all(lam >= -1e-9, axis=-1)
                  & (lam.sum(axis=-1) <= 1.0 + 1e-9))
    inside = inside_tet.any(axis=-1)                              # (G, K)
    return (~inside).astype(np.float32)


# --------------------------------------------------------------------------- #
# Public wrapper: JAX/Pallas equivalent of get_loss.forward
# --------------------------------------------------------------------------- #
def get_loss_forward(xyz, num_class, skel_xyz, weights=None):
    """xyz: (B, N, 6) — coords in [..., :3]; normals and `weights` are unused
    downstream in the reference and are ignored here too.
    skel_xyz: (B, num_class * CONVEX_K, 3)."""
    xyz = jnp.asarray(xyz, dtype=jnp.float32)
    B, N, _ = xyz.shape
    skel = jnp.asarray(skel_xyz, dtype=jnp.float32)
    S = skel.shape[1]
    assert S == num_class * CONVEX_K

    # TODO(synk): scipy.spatial.ConvexHull (qhull) has no Pallas/TPU
    # equivalent; hull-vertex labelling stays on the host (as in the
    # reference) but is fully vectorized with batched numpy solves.
    skel_np = np.asarray(jax.device_get(skel))
    groups = skel_np.reshape(B * num_class, CONVEX_K, 3)
    labels = _hull_vertex_labels_batched(groups).reshape(B, S)    # 1 = vertex
    in_convex = int(B * S - labels.sum())

    # Precompute the static same-class structure + hull labels into a single
    # lane-dense (B, S, S) mask: pair[b, l, k] = same_class(l,k) & l is vertex.
    cls = np.arange(S) // CONVEX_K
    same_class = (cls[:, None] == cls[None, :]).astype(np.float32)        # (S,S)
    pair_mask = same_class[None, :, :] * labels[:, :, None]               # (B,S,S)
    nonvertex = (1.0 - labels)[:, None, :]                                # (B,1,S)

    # Lane-dense coordinate layouts for the kernel.
    xyz_t = jnp.transpose(xyz[:, :, :3], (0, 2, 1))                       # (B,3,N)
    skel_t = jnp.transpose(skel, (0, 2, 1))                               # (B,3,S)

    cd_part, conv_part = _loss_pallas(
        xyz_t, skel, skel_t,
        jnp.asarray(pair_mask, dtype=jnp.float32),
        jnp.asarray(nonvertex, dtype=jnp.float32))

    loss_cd = jnp.sum(cd_part) / B
    loss_convex = jnp.sum(conv_part) / (B * num_class)
    final_loss = 1.0 * loss_convex + 0.1 * loss_cd
    print('Points in convex hull:', in_convex)
    return final_loss


if __name__ == "__main__":
    key = jax.random.PRNGKey(0)
    B, N, num_class = 2, 64, 4
    k1, k2, k3 = jax.random.split(key, 3)
    xyz = jax.random.uniform(k1, (B, N, 6), dtype=jnp.float32)
    skel_xyz = jax.random.uniform(k2, (B, num_class * CONVEX_K, 3),
                                  dtype=jnp.float32)
    weights = jax.random.uniform(k3, (B, N), dtype=jnp.float32)  # unused, like the reference

    out = get_loss_forward(xyz, num_class, skel_xyz, weights)
    jax.block_until_ready(out)
    print("KERNEL_OK")
</pallas_src>

<mosaic_0001>
module attributes {stable_mosaic.version = 11 : i64} {
  func.func @_loss_kernel(%arg0: i32, %arg1: memref<1x3x64xf32, #tpu.memory_space<vmem>>, %arg2: memref<1x40x3xf32, #tpu.memory_space<vmem>>, %arg3: memref<1x3x40xf32, #tpu.memory_space<vmem>>, %arg4: memref<1x40x40xf32, #tpu.memory_space<vmem>>, %arg5: memref<1x1x40xf32, #tpu.memory_space<vmem>>, %arg6: memref<1x1x1xf32, #tpu.memory_space<vmem>>, %arg7: memref<1x1x1xf32, #tpu.memory_space<vmem>>) attributes {dimension_semantics = [#tpu.dimension_semantics<parallel>], iteration_bounds = array<i64: 2>, scalar_prefetch = 0 : i64, scratch_operands = 0 : i64, tpu.core_type = #tpu.core_type<tc>, window_params = [{transform_indices = @transform_0, window_bounds = array<i64: 1, 3, 64>}, {transform_indices = @transform_1, window_bounds = array<i64: 1, 40, 3>}, {transform_indices = @transform_2, window_bounds = array<i64: 1, 3, 40>}, {transform_indices = @transform_3, window_bounds = array<i64: 1, 40, 40>}, {transform_indices = @transform_4, window_bounds = array<i64: 1, 1, 40>}, {transform_indices = @transform_5, window_bounds = array<i64: 1, 1, 1>}, {transform_indices = @transform_6, window_bounds = array<i64: 1, 1, 1>}]} {
    %c0 = arith.constant 0 : index
    %c0_0 = arith.constant 0 : index
    %c0_1 = arith.constant 0 : index
    %0 = vector.load %arg1[%c0, %c0_0, %c0_1] : memref<1x3x64xf32, #tpu.memory_space<vmem>>, vector<1x3x64xf32>
    %1 = vector.shape_cast %0 : vector<1x3x64xf32> to vector<3x64xf32>
    %c0_2 = arith.constant 0 : index
    %c0_3 = arith.constant 0 : index
    %c0_4 = arith.constant 0 : index
    %2 = vector.load %arg2[%c0_2, %c0_3, %c0_4] : memref<1x40x3xf32, #tpu.memory_space<vmem>>, vector<1x40x3xf32>
    %3 = vector.shape_cast %2 : vector<1x40x3xf32> to vector<40x3xf32>
    %c0_5 = arith.constant 0 : index
    %c0_6 = arith.constant 0 : index
    %c0_7 = arith.constant 0 : index
    %4 = vector.load %arg3[%c0_5, %c0_6, %c0_7] : memref<1x3x40xf32, #tpu.memory_space<vmem>>, vector<1x3x40xf32>
    %5 = vector.shape_cast %4 : vector<1x3x40xf32> to vector<3x40xf32>
    %6 = vector.extract_strided_slice %3 {offsets = [0, 0], sizes = [40, 1], strides = [1, 1]} : vector<40x3xf32> to vector<40x1xf32>
    %7 = vector.extract_strided_slice %1 {offsets = [0, 0], sizes = [1, 64], strides = [1, 1]} : vector<3x64xf32> to vector<1x64xf32>
    %8 = vector.broadcast %6 : vector<40x1xf32> to vector<40x64xf32>
    %9 = vector.broadcast %7 : vector<1x64xf32> to vector<40x64xf32>
    %10 = arith.subf %8, %9 : vector<40x64xf32>
    %11 = arith.mulf %10, %10 : vector<40x64xf32>
    %12 = vector.extract_strided_slice %3 {offsets = [0, 1], sizes = [40, 1], strides = [1, 1]} : vector<40x3xf32> to vector<40x1xf32>
    %13 = vector.extract_strided_slice %1 {offsets = [1, 0], sizes = [1, 64], strides = [1, 1]} : vector<3x64xf32> to vector<1x64xf32>
    %14 = vector.broadcast %12 : vector<40x1xf32> to vector<40x64xf32>
    %15 = vector.broadcast %13 : vector<1x64xf32> to vector<40x64xf32>
    %16 = arith.subf %14, %15 : vector<40x64xf32>
    %17 = arith.mulf %16, %16 : vector<40x64xf32>
    %18 = arith.addf %11, %17 : vector<40x64xf32>
    %19 = vector.extract_strided_slice %3 {offsets = [0, 2], sizes = [40, 1], strides = [1, 1]} : vector<40x3xf32> to vector<40x1xf32>
    %20 = vector.extract_strided_slice %1 {offsets = [2, 0], sizes = [1, 64], strides = [1, 1]} : vector<3x64xf32> to vector<1x64xf32>
    %21 = vector.broadcast %19 : vector<40x1xf32> to vector<40x64xf32>
    %22 = vector.broadcast %20 : vector<1x64xf32> to vector<40x64xf32>
    %23 = arith.subf %21, %22 : vector<40x64xf32>
    %24 = arith.mulf %23, %23 : vector<40x64xf32>
    %25 = arith.addf %18, %24 : vector<40x64xf32>
    %cst = arith.constant dense<0x7F800000> : vector<64xf32>
    %26 = vector.multi_reduction <minimumf>, %25, %cst [0] : vector<40x64xf32> to vector<64xf32>
    %27 = vector.shape_cast %26 : vector<64xf32> to vector<1x64xf32>
    %cst_8 = arith.constant dense<0x7F800000> : vector<40xf32>
    %28 = vector.multi_reduction <minimumf>, %25, %cst_8 [1] : vector<40x64xf32> to vector<40xf32>
    %29 = vector.shape_cast %28 : vector<40xf32> to vector<40x1xf32>
    %30 = math.sqrt %27 : vector<1x64xf32>
    %cst_9 = arith.constant dense<0.000000e+00> : vector<1xf32>
    %31 = vector.multi_reduction <add>, %30, %cst_9 [1] : vector<1x64xf32> to vector<1xf32>
    %32 = vector.shape_cast %31 : vector<1xf32> to vector<1x1xf32>
    %33 = math.sqrt %29 : vector<40x1xf32>
    %cst_10 = arith.constant dense<0.000000e+00> : vector<1xf32>
    %34 = vector.multi_reduction <add>, %33, %cst_10 [0] : vector<40x1xf32> to vector<1xf32>
    %35 = vector.shape_cast %34 : vector<1xf32> to vector<1x1xf32>
    %36 = arith.addf %32, %35 : vector<1x1xf32>
    %c0_11 = arith.constant 0 : index
    %c0_12 = arith.constant 0 : index
    %c0_13 = arith.constant 0 : index
    %37 = vector.load %arg6[%c0_11, %c0_12, %c0_13] : memref<1x1x1xf32, #tpu.memory_space<vmem>>, vector<1x1x1xf32>
    %38 = vector.shape_cast %37 : vector<1x1x1xf32> to vector<1x1xf32>
    %39 = vector.shape_cast %36 : vector<1x1xf32> to vector<1x1x1xf32>
    tpu.vector_store %arg6[%c0_11, %c0_12, %c0_13], %39 {strides = array<i32>} : memref<1x1x1xf32, #tpu.memory_space<vmem>>, vector<1x1x1xf32>,
    %40 = vector.extract_strided_slice %3 {offsets = [0, 0], sizes = [40, 1], strides = [1, 1]} : vector<40x3xf32> to vector<40x1xf32>
    %41 = vector.extract_strided_slice %5 {offsets = [0, 0], sizes = [1, 40], strides = [1, 1]} : vector<3x40xf32> to vector<1x40xf32>
    %42 = vector.broadcast %40 : vector<40x1xf32> to vector<40x40xf32>
    %43 = vector.broadcast %41 : vector<1x40xf32> to vector<40x40xf32>
    %44 = arith.subf %42, %43 : vector<40x40xf32>
    %45 = arith.mulf %44, %44 : vector<40x40xf32>
    %46 = vector.extract_strided_slice %3 {offsets = [0, 1], sizes = [40, 1], strides = [1, 1]} : vector<40x3xf32> to vector<40x1xf32>
    %47 = vector.extract_strided_slice %5 {offsets = [1, 0], sizes = [1, 40], strides = [1, 1]} : vector<3x40xf32> to vector<1x40xf32>
    %48 = vector.broadcast %46 : vector<40x1xf32> to vector<40x40xf32>
    %49 = vector.broadcast %47 : vector<1x40xf32> to vector<40x40xf32>
    %50 = arith.subf %48, %49 : vector<40x40xf32>
    %51 = arith.mulf %50, %50 : vector<40x40xf32>
    %52 = arith.addf %45, %51 : vector<40x40xf32>
    %53 = vector.extract_strided_slice %3 {offsets = [0, 2], sizes = [40, 1], strides = [1, 1]} : vector<40x3xf32> to vector<40x1xf32>
    %54 = vector.extract_strided_slice %5 {offsets = [2, 0], sizes = [1, 40], strides = [1, 1]} : vector<3x40xf32> to vector<1x40xf32>
    %55 = vector.broadcast %53 : vector<40x1xf32> to vector<40x40xf32>
    %56 = vector.broadcast %54 : vector<1x40xf32> to vector<40x40xf32>
    %57 = arith.subf %55, %56 : vector<40x40xf32>
    %58 = arith.mulf %57, %57 : vector<40x40xf32>
    %59 = arith.addf %52, %58 : vector<40x40xf32>
    %c0_14 = arith.constant 0 : index
    %c0_15 = arith.constant 0 : index
    %c0_16 = arith.constant 0 : index
    %60 = vector.load %arg4[%c0_14, %c0_15, %c0_16] : memref<1x40x40xf32, #tpu.memory_space<vmem>>, vector<1x40x40xf32>
    %61 = vector.shape_cast %60 : vector<1x40x40xf32> to vector<40x40xf32>
    %cst_17 = arith.constant 5.000000e-01 : f32
    %62 = vector.broadcast %cst_17 : f32 to vector<40x40xf32>
    %63 = arith.cmpf ogt, %61, %62 : vector<40x40xf32>
    %cst_18 = arith.constant 1.000000e+30 : f32
    %64 = vector.broadcast %cst_18 : f32 to vector<40x40xf32>
    %65 = arith.select %63, %59, %64 : vector<40x40xi1>, vector<40x40xf32>
    %cst_19 = arith.constant dense<0x7F800000> : vector<40xf32>
    %66 = vector.multi_reduction <minimumf>, %65, %cst_19 [0] : vector<40x40xf32> to vector<40xf32>
    %67 = vector.shape_cast %66 : vector<40xf32> to vector<1x40xf32>
    %cst_20 = arith.constant 1.000000e+05 : f32
    %68 = vector.broadcast %cst_20 : f32 to vector<1x40xf32>
    %69 = arith.minimumf %68, %67 : vector<1x40xf32>
    %c0_21 = arith.constant 0 : index
    %c0_22 = arith.constant 0 : index
    %c0_23 = arith.constant 0 : index
    %70 = vector.load %arg5[%c0_21, %c0_22, %c0_23] : memref<1x1x40xf32, #tpu.memory_space<vmem>>, vector<1x1x40xf32>
    %71 = vector.shape_cast %70 : vector<1x1x40xf32> to vector<1x40xf32>
    %72 = arith.mulf %69, %71 : vector<1x40xf32>
    %cst_24 = arith.constant dense<0.000000e+00> : vector<1xf32>
    %73 = vector.multi_reduction <add>, %72, %cst_24 [1] : vector<1x40xf32> to vector<1xf32>
    %74 = vector.shape_cast %73 : vector<1xf32> to vector<1x1xf32>
    %c0_25 = arith.constant 0 : index
    %c0_26 = arith.constant 0 : index
    %c0_27 = arith.constant 0 : index
    %75 = vector.load %arg7[%c0_25, %c0_26, %c0_27] : memref<1x1x1xf32, #tpu.memory_space<vmem>>, vector<1x1x1xf32>
    %76 = vector.shape_cast %75 : vector<1x1x1xf32> to vector<1x1xf32>
    %77 = vector.shape_cast %74 : vector<1x1xf32> to vector<1x1x1xf32>
    tpu.vector_store %arg7[%c0_25, %c0_26, %c0_27], %77 {strides = array<i32>} : memref<1x1x1xf32, #tpu.memory_space<vmem>>, vector<1x1x1xf32>,
    return
  }
  func.func @transform_0(%arg0: i32) -> (i32, i32, i32) {
    %c0_i32 = arith.constant 0 : i32
    %c0_i32_0 = arith.constant 0 : i32
    %c0_i32_1 = arith.constant 0 : i32
    return %arg0, %c0_i32, %c0_i32_0 : i32, i32, i32
  }
  func.func @transform_1(%arg0: i32) -> (i32, i32, i32) {
    %c0_i32 = arith.constant 0 : i32
    %c0_i32_0 = arith.constant 0 : i32
    %c0_i32_1 = arith.constant 0 : i32
    return %arg0, %c0_i32, %c0_i32_0 : i32, i32, i32
  }
  func.func @transform_2(%arg0: i32) -> (i32, i32, i32) {
    %c0_i32 = arith.constant 0 : i32
    %c0_i32_0 = arith.constant 0 : i32
    %c0_i32_1 = arith.constant 0 : i32
    return %arg0, %c0_i32, %c0_i32_0 : i32, i32, i32
  }
  func.func @transform_3(%arg0: i32) -> (i32, i32, i32) {
    %c0_i32 = arith.constant 0 : i32
    %c0_i32_0 = arith.constant 0 : i32
    %c0_i32_1 = arith.constant 0 : i32
    return %arg0, %c0_i32, %c0_i32_0 : i32, i32, i32
  }
  func.func @transform_4(%arg0: i32) -> (i32, i32, i32) {
    %c0_i32 = arith.constant 0 : i32
    %c0_i32_0 = arith.constant 0 : i32
    %c0_i32_1 = arith.constant 0 : i32
    return %arg0, %c0_i32, %c0_i32_0 : i32, i32, i32
  }
  func.func @transform_5(%arg0: i32) -> (i32, i32, i32) {
    %c0_i32 = arith.constant 0 : i32
    %c0_i32_0 = arith.constant 0 : i32
    %c0_i32_1 = arith.constant 0 : i32
    return %arg0, %c0_i32, %c0_i32_0 : i32, i32, i32
  }
  func.func @transform_6(%arg0: i32) -> (i32, i32, i32) {
    %c0_i32 = arith.constant 0 : i32
    %c0_i32_0 = arith.constant 0 : i32
    %c0_i32_1 = arith.constant 0 : i32
    return %arg0, %c0_i32, %c0_i32_0 : i32, i32, i32
  }
}

</mosaic_0001>

<llo_original>
// kernel: tpu_custom_call.1
$region0: #{tpu_custom_call.1}
  #allocation0 [shape = 'u32[]', space=smem, size = 0x4, offset = 0x4, fixed_abs, tag = 'smem constant byte address 0x4 - core index']
  #allocation1 [shape = 'u32[144,128]{1,0:T(1,128)}', space=vmem, size = 0x12000, scoped, tag = 'internal scratch']
  %s0 = inlined_call_operand.vmem [shape: f32[2,3,64], index: 0, kind: input, shape index: {}]
  %s1 = inlined_call_operand.vmem [shape: f32[2,40,3], index: 1, kind: input, shape index: {}]
  %s2 = inlined_call_operand.vmem [shape: f32[2,3,40], index: 2, kind: input, shape index: {}]
  %s3 = inlined_call_operand.vmem [shape: f32[2,40,40], index: 3, kind: input, shape index: {}]
  %s4 = inlined_call_operand.vmem [shape: f32[2,1,40], index: 4, kind: input, shape index: {}]
  %s5 = inlined_call_operand.vmem [shape: f32[2,1,1], index: 5, kind: output, shape index: {0}]
  %s6 = inlined_call_operand.vmem [shape: f32[2,1,1], index: 6, kind: output, shape index: {1}]
  %7 = xla_tuple %s5, %s6
  %s8 = sld [smem:[#allocation0]]
  $region61: #{tpu_custom_call.1} parent=0
    _
  %s10 = ssub.s32 1, %s8
  %s11 = scalar_select 0, %s10, %s8
  loop: start=0, step=1, limit=4
  $region2: #{tpu_custom_call.1} parent=0 // loop_pre_header
    _
  $region3: #{tpu_custom_call.1} parent=0 // loop_header
    %s13 = sphi 0, %s17
    %p14 = scmp.ge.s32.totalorder %s13, 4
    %s23 = sphi 0, %s25
    %s26 = sphi 0, %s23
    %s27 = sphi 0, %s26
    %s43 = sphi 0, %s27
    %s49 = sphi 0, %s51
    %s52 = sphi 0, %s49
    %s53 = sphi 0, %s52
    %s69 = sphi 0, %s53
    %s75 = sphi 0, %s77
    %s78 = sphi 0, %s75
    %s79 = sphi 0, %s78
    %s95 = sphi 0, %s79
    %s101 = sphi 0, %s103
    %s104 = sphi 0, %s101
    %s105 = sphi 0, %s104
    %s121 = sphi 0, %s105
    %s127 = sphi 0, %s129
    %s130 = sphi 0, %s127
    %s131 = sphi 0, %s130
    %s147 = sphi 0, %s131
    %s153 = sphi 0, %s155
    %s156 = sphi 0, %s153
    %s157 = sphi 0, %s156
    %s173 = sphi 0, %s157
    %s179 = sphi 0, %s181
    %s182 = sphi 0, %s179
    %s183 = sphi 0, %s182
    %s199 = sphi 0, %s183
  $region4: #{tpu_custom_call.1} parent=0 // loop_header_branch
    %16 = sbr.rel (%p14) target = $region8
  $region5: #{tpu_custom_call.1} parent=0 // loop_body
    %s18 = ssub.s32 %s13, 1
    %s19 = ssub.s32 %s13, 2
    %s20 = sadd.s32 %s13, 1
    %s21 = ssub.s32 %s13, %s20
    %p22 = scmp.eq.s32.totalorder %s21, 0
    %s24 = sadd.s32 %s23, 1
    %s25 = scalar_select %p22, %s23, %s24
    %p28 = pneg %p22
    %p29 = scmp.eq.s32.totalorder %s13, 1
    %p30 = por %p28, %p29
    %p31 = scmp.ne.s32.totalorder %s23, %s26
    %p32 = scmp.eq.s32.totalorder %s13, 0
    %p33 = por %p31, %p32
    %p34 = scmp.ne.s32.totalorder %s23, %s26
    %p35 = scmp.eq.s32.totalorder %s18, 1
    %p36 = por %p34, %p35
    %p37 = scmp.ne.s32.totalorder %s26, %s27
    %p38 = scmp.eq.s32.totalorder %s18, 0
    %p39 = por %p37, %p38
    %p40 = scmp.ne.s32.totalorder %s26, %s27
    %p41 = scmp.eq.s32.totalorder %s19, 1
    %p42 = por %p40, %p41
    %p44 = scmp.ne.s32.totalorder %s27, %s43
    %p45 = scmp.eq.s32.totalorder %s19, 0
    %p46 = por %p44, %p45
    %s47 = ssub.s32 %s13, %s20
    %p48 = scmp.eq.s32.totalorder %s47, 0
    %s50 = sadd.s32 %s49, 1
    %s51 = scalar_select %p48, %s49, %s50
    %p54 = pneg %p48
    %p55 = scmp.eq.s32.totalorder %s13, 1
    %p56 = por %p54, %p55
    %p57 = scmp.ne.s32.totalorder %s49, %s52
    %p58 = scmp.eq.s32.totalorder %s13, 0
    %p59 = por %p57, %p58
    %p60 = scmp.ne.s32.totalorder %s49, %s52
    %p61 = scmp.eq.s32.totalorder %s18, 1
    %p62 = por %p60, %p61
    %p63 = scmp.ne.s32.totalorder %s52, %s53
    %p64 = scmp.eq.s32.totalorder %s18, 0
    %p65 = por %p63, %p64
    %p66 = scmp.ne.s32.totalorder %s52, %s53
    %p67 = scmp.eq.s32.totalorder %s19, 1
    %p68 = por %p66, %p67
    %p70 = scmp.ne.s32.totalorder %s53, %s69
    %p71 = scmp.eq.s32.totalorder %s19, 0
    %p72 = por %p70, %p71
    %s73 = ssub.s32 %s13, %s20
    %p74 = scmp.eq.s32.totalorder %s73, 0
    %s76 = sadd.s32 %s75, 1
    %s77 = scalar_select %p74, %s75, %s76
    %p80 = pneg %p74
    %p81 = scmp.eq.s32.totalorder %s13, 1
    %p82 = por %p80, %p81
    %p83 = scmp.ne.s32.totalorder %s75, %s78
    %p84 = scmp.eq.s32.totalorder %s13, 0
    %p85 = por %p83, %p84
    %p86 = scmp.ne.s32.totalorder %s75, %s78
    %p87 = scmp.eq.s32.totalorder %s18, 1
    %p88 = por %p86, %p87
    %p89 = scmp.ne.s32.totalorder %s78, %s79
    %p90 = scmp.eq.s32.totalorder %s18, 0
    %p91 = por %p89, %p90
    %p92 = scmp.ne.s32.totalorder %s78, %s79
    %p93 = scmp.eq.s32.totalorder %s19, 1
    %p94 = por %p92, %p93
    %p96 = scmp.ne.s32.totalorder %s79, %s95
    %p97 = scmp.eq.s32.totalorder %s19, 0
    %p98 = por %p96, %p97
    %s99 = ssub.s32 %s13, %s20
    %p100 = scmp.eq.s32.totalorder %s99, 0
    %s102 = sadd.s32 %s101, 1
    %s103 = scalar_select %p100, %s101, %s102
    %p106 = pneg %p100
    %p107 = scmp.eq.s32.totalorder %s13, 1
    %p108 = por %p106, %p107
    %p109 = scmp.ne.s32.totalorder %s101, %s104
    %p110 = scmp.eq.s32.totalorder %s13, 0
    %p111 = por %p109, %p110
    %p112 = scmp.ne.s32.totalorder %s101, %s104
    %p113 = scmp.eq.s32.totalorder %s18, 1
    %p114 = por %p112, %p113
    %p115 = scmp.ne.s32.totalorder %s104, %s105
    %p116 = scmp.eq.s32.totalorder %s18, 0
    %p117 = por %p115, %p116
    %p118 = scmp.ne.s32.totalorder %s104, %s105
    %p119 = scmp.eq.s32.totalorder %s19, 1
    %p120 = por %p118, %p119
    %p122 = scmp.ne.s32.totalorder %s105, %s121
    %p123 = scmp.eq.s32.totalorder %s19, 0
    %p124 = por %p122, %p123
    %s125 = ssub.s32 %s13, %s20
    %p126 = scmp.eq.s32.totalorder %s125, 0
    %s128 = sadd.s32 %s127, 1
    %s129 = scalar_select %p126, %s127, %s128
    %p132 = pneg %p126
    %p133 = scmp.eq.s32.totalorder %s13, 1
    %p134 = por %p132, %p133
    %p135 = scmp.ne.s32.totalorder %s127, %s130
    %p136 = scmp.eq.s32.totalorder %s13, 0
    %p137 = por %p135, %p136
    %p138 = scmp.ne.s32.totalorder %s127, %s130
    %p139 = scmp.eq.s32.totalorder %s18, 1
    %p140 = por %p138, %p139
    %p141 = scmp.ne.s32.totalorder %s130, %s131
    %p142 = scmp.eq.s32.totalorder %s18, 0
    %p143 = por %p141, %p142
    %p144 = scmp.ne.s32.totalorder %s130, %s131
    %p145 = scmp.eq.s32.totalorder %s19, 1
    %p146 = por %p144, %p145
    %p148 = scmp.ne.s32.totalorder %s131, %s147
    %p149 = scmp.eq.s32.totalorder %s19, 0
    %p150 = por %p148, %p149
    %s151 = ssub.s32 %s13, %s20
    %p152 = scmp.eq.s32.totalorder %s151, 0
    %s154 = sadd.s32 %s153, 1
    %s155 = scalar_select %p152, %s153, %s154
    %p158 = pneg %p152
    %p159 = scmp.eq.s32.totalorder %s13, 1
    %p160 = por %p158, %p159
    %p161 = scmp.ne.s32.totalorder %s153, %s156
    %p162 = scmp.eq.s32.totalorder %s13, 0
    %p163 = por %p161, %p162
    %p164 = scmp.ne.s32.totalorder %s153, %s156
    %p165 = scmp.eq.s32.totalorder %s18, 1
    %p166 = por %p164, %p165
    %p167 = scmp.ne.s32.totalorder %s156, %s157
    %p168 = scmp.eq.s32.totalorder %s18, 0
    %p169 = por %p167, %p168
    %p170 = scmp.ne.s32.totalorder %s156, %s157
    %p171 = scmp.eq.s32.totalorder %s19, 1
    %p172 = por %p170, %p171
    %p174 = scmp.ne.s32.totalorder %s157, %s173
    %p175 = scmp.eq.s32.totalorder %s19, 0
    %p176 = por %p174, %p175
    %s177 = ssub.s32 %s13, %s20
    %p178 = scmp.eq.s32.totalorder %s177, 0
    %s180 = sadd.s32 %s179, 1
    %s181 = scalar_select %p178, %s179, %s180
    %p184 = pneg %p178
    %p185 = scmp.eq.s32.totalorder %s13, 1
    %p186 = por %p184, %p185
    %p187 = scmp.ne.s32.totalorder %s179, %s182
    %p188 = scmp.eq.s32.totalorder %s13, 0
    %p189 = por %p187, %p188
    %p190 = scmp.ne.s32.totalorder %s179, %s182
    %p191 = scmp.eq.s32.totalorder %s18, 1
    %p192 = por %p190, %p191
    %p193 = scmp.ne.s32.totalorder %s182, %s183
    %p194 = scmp.eq.s32.totalorder %s18, 0
    %p195 = por %p193, %p194
    %p196 = scmp.ne.s32.totalorder %s182, %s183
    %p197 = scmp.eq.s32.totalorder %s19, 1
    %p198 = por %p196, %p197
    %p200 = scmp.ne.s32.totalorder %s183, %s199
    %p201 = scmp.eq.s32.totalorder %s19, 0
    %p202 = por %p200, %p201
    %p203 = scmp.le.s32.totalorder 1, %s13
    %p204 = scmp.lt.s32.totalorder %s13, 3
    %p205 = pnand %p203, %p204
    %p206 = pneg %p205
    // Predicated region
    $region9: #{tpu_custom_call.1} parent=5 // pred_check
      _
    $region10: #{tpu_custom_call.1} parent=5 // pred_check_branch
      %208 = sbr.rel (%p205) target = $region12
    $region11: #{tpu_custom_call.1} parent=5 // pred_region
      %s209 = ssub.s32 %s13, 1
    $region12: #{tpu_custom_call.1} parent=5 // pred_fallthru
      _
    %p210 = scmp.lt.s32.totalorder %s13, 2
    // Predicated region
    $region13: #{tpu_custom_call.1} parent=5 // pred_check
      %p211 = pneg %p210
    $region14: #{tpu_custom_call.1} parent=5 // pred_check_branch
      %213 = sbr.rel (%p211) target = $region16
    $region15: #{tpu_custom_call.1} parent=5 // pred_region
      // Predicated region
      $region17: #{tpu_custom_call.1} parent=15 // pred_check
        %p214 = pneg %p33
      $region18: #{tpu_custom_call.1} parent=15 // pred_check_branch
        %216 = sbr.rel (%p214) target = $region20
      $region19: #{tpu_custom_call.1} parent=15 // pred_region
        %p217 = scmp.lt.s32.totalorder %s13, 1
        %s218 = scalar_select %p217, %s13, 1
        %s219 = smul.addr %s218, 4
        %s220 = scalar_lea.vmem %s0, %s219
      $region20: #{tpu_custom_call.1} parent=15 // pred_fallthru
        _
      // Predicated region
      $region21: #{tpu_custom_call.1} parent=15 // pred_check
        %p221 = pneg %p59
      $region22: #{tpu_custom_call.1} parent=15 // pred_check_branch
        %223 = sbr.rel (%p221) target = $region24
      $region23: #{tpu_custom_call.1} parent=15 // pred_region
        %p224 = scmp.lt.s32.totalorder %s13, 1
        %s225 = scalar_select %p224, %s13, 1
        %s226 = smul.addr %s225, 5
        %s227 = smul.addr %s226, 8
        %s228 = scalar_lea.vmem %s1, %s227
      $region24: #{tpu_custom_call.1} parent=15 // pred_fallthru
        _
      // Predicated region
      $region25: #{tpu_custom_call.1} parent=15 // pred_check
        %p229 = pneg %p85
      $region26: #{tpu_custom_call.1} parent=15 // pred_check_branch
        %231 = sbr.rel (%p229) target = $region28
      $region27: #{tpu_custom_call.1} parent=15 // pred_region
        %p232 = scmp.lt.s32.totalorder %s13, 1
        %s233 = scalar_select %p232, %s13, 1
        %s234 = smul.addr %s233, 4
        %s235 = scalar_lea.vmem %s2, %s234
      $region28: #{tpu_custom_call.1} parent=15 // pred_fallthru
        _
      // Predicated region
      $region29: #{tpu_custom_call.1} parent=15 // pred_check
        %p236 = pneg %p111
      $region30: #{tpu_custom_call.1} parent=15 // pred_check_branch
        %238 = sbr.rel (%p236) target = $region32
      $region31: #{tpu_custom_call.1} parent=15 // pred_region
        %p239 = scmp.lt.s32.totalorder %s13, 1
        %s240 = scalar_select %p239, %s13, 1
        %s241 = smul.addr %s240, 5
        %s242 = smul.addr %s241, 8
        %s243 = scalar_lea.vmem %s3, %s242
      $region32: #{tpu_custom_call.1} parent=15 // pred_fallthru
        _
      // Predicated region
      $region33: #{tpu_custom_call.1} parent=15 // pred_check
        %p244 = pneg %p137
      $region34: #{tpu_custom_call.1} parent=15 // pred_check_branch
        %246 = sbr.rel (%p244) target = $region36
      $region35: #{tpu_custom_call.1} parent=15 // pred_region
        %p247 = scmp.lt.s32.totalorder %s13, 1
        %s248 = scalar_select %p247, %s13, 1
        %s249 = scalar_lea.vmem %s4, %s248
      $region36: #{tpu_custom_call.1} parent=15 // pred_fallthru
        _
    $region16: #{tpu_custom_call.1} parent=5 // pred_fallthru
      _
    %p250 = scmp.le.s32.totalorder 1, %s13
    %p251 = scmp.lt.s32.totalorder %s13, 3
    %p252 = pnand %p250, %p251
    %p253 = pneg %p252
    // Predicated region
    $region37: #{tpu_custom_call.1} parent=5 // pred_check
      _
    $region38: #{tpu_custom_call.1} parent=5 // pred_check_branch
      %255 = sbr.rel (%p252) target = $region40
    $region39: #{tpu_custom_call.1} parent=5 // pred_region
      %s256 = ssub.s32 %s13, 1
      %p257 = scmp.lt.s32.totalorder %s18, 1
      %s258 = scalar_select %p257, %s18, 1
      %s259 = smul.addr %s258, 4
      %s260 = scalar_lea.vmem %s0, %s259
      %p261 = pneg %p39
      %p262 = pneg %p36
      %p263 = scmp.lt.s32.totalorder %s18, 1
      %s264 = scalar_select %p263, %s18, 1
      %s265 = smul.addr %s264, 5
      %s266 = smul.addr %s265, 8
      %s267 = scalar_lea.vmem %s1, %s266
      %p268 = pneg %p65
      %p269 = pneg %p62
      %p270 = scmp.lt.s32.totalorder %s18, 1
      %s271 = scalar_select %p270, %s18, 1
      %s272 = smul.addr %s271, 4
      %s273 = scalar_lea.vmem %s2, %s272
      %p274 = pneg %p91
      %p275 = pneg %p88
      %p276 = scmp.lt.s32.totalorder %s18, 1
      %s277 = scalar_select %p276, %s18, 1
      %s278 = smul.addr %s277, 5
      %s279 = smul.addr %s278, 8
      %s280 = scalar_lea.vmem %s3, %s279
      %p281 = pneg %p117
      %p282 = pneg %p114
      %p283 = scmp.lt.s32.totalorder %s18, 1
      %s284 = scalar_select %p283, %s18, 1
      %s285 = scalar_lea.vmem %s4, %s284
      %p286 = pneg %p143
      %p287 = pneg %p140
      %p288 = pneg %p169
      %p289 = pneg %p166
      %p290 = scmp.lt.s32.totalorder %s18, 1
      %s291 = scalar_select %p290, %s18, 1
      %s292 = scalar_lea.vmem %s5, %s291
      %p293 = pneg %p195
      %p294 = pneg %p192
      %p295 = scmp.lt.s32.totalorder %s18, 1
      %s296 = scalar_select %p295, %s18, 1
      %s297 = scalar_lea.vmem %s6, %s296
      %p298 = scmp.lt.s32.totalorder %s18, 1
      %s299 = scalar_select %p298, %s18, 1
      %s300 = smul.addr %s299, 4
      %s301 = scalar_lea.vmem %s0, %s300
      %p302 = scmp.lt.s32.totalorder %s18, 1
      %s303 = scalar_select %p302, %s18, 1
      %s304 = smul.addr %s303, 5
      %s305 = smul.addr %s304, 8
      %s306 = scalar_lea.vmem %s1, %s305
      %p307 = scmp.lt.s32.totalorder %s18, 1
      %s308 = scalar_select %p307, %s18, 1
      %s309 = smul.addr %s308, 4
      %s310 = scalar_lea.vmem %s2, %s309
      %p311 = scmp.lt.s32.totalorder %s18, 1
      %s312 = scalar_select %p311, %s18, 1
      %s313 = smul.addr %s312, 5
      %s314 = smul.addr %s313, 8
      %s315 = scalar_lea.vmem %s3, %s314
      %p316 = scmp.lt.s32.totalorder %s18, 1
      %s317 = scalar_select %p316, %s18, 1
      %s318 = scalar_lea.vmem %s4, %s317
      %p319 = scmp.lt.s32.totalorder %s18, 1
      %s320 = scalar_select %p319, %s18, 1
      %s321 = scalar_lea.vmem %s5, %s320
      %p322 = scmp.lt.s32.totalorder %s18, 1
      %s323 = scalar_select %p322, %s18, 1
      %s324 = scalar_lea.vmem %s6, %s323
      %v325 = vld [vmem:[%s301] sm:$0x7]
      %v326 = vld [vmem:[%s306] sm:$0xff]
      %v327 = vld [vmem:[%s306 + $0x8] sm:$0xff]
      %v328 = vld [vmem:[%s306 + $0x10] sm:$0xff]
      %v329 = vld [vmem:[%s306 + $0x18] sm:$0xff]
      %v330 = vld [vmem:[%s306 + $0x20] sm:$0xff]
      %v331 = vld [vmem:[%s310] sm:$0x7]
      %333 = vset.pattern.permute.xlu0 0
      %334 = vperm.xlu0 %333, %v326
      %v335 = vpop.permute.xlu0 %334
      %338 = vset.pattern.permute.xlu0 0
      %339 = vperm.xlu0 %338, %v327
      %v340 = vpop.permute.xlu0 %339
      %343 = vset.pattern.permute.xlu0 0
      %344 = vperm.xlu0 %343, %v328
      %v345 = vpop.permute.xlu0 %344
      %348 = vset.pattern.permute.xlu0 0
      %349 = vperm.xlu0 %348, %v329
      %v350 = vpop.permute.xlu0 %349
      %353 = vset.pattern.permute.xlu0 0
      %354 = vperm.xlu0 %353, %v330
      %v355 = vpop.permute.xlu0 %354
      %v357 = vlaneseq
      %v358 = vshrl.u32 %v357, 7
      %v359 = vsub.s32 0, %v358
      %v360 = vrot.slane %v325, %v359
      %v361 = vsub.f32 %v335, %v360
      %v362 = vsub.f32 %v340, %v360
      %v363 = vsub.f32 %v345, %v360
      %v364 = vsub.f32 %v350, %v360
      %v365 = vsub.f32 %v355, %v360
      %v366 = vmul.f32 %v361, %v361
      %v367 = vmul.f32 %v362, %v362
      %v368 = vmul.f32 %v363, %v363
      %v369 = vmul.f32 %v364, %v364
      %v370 = vmul.f32 %v365, %v365
      %371 = vset.pattern.permute.xlu0 1
      %372 = vperm.xlu0 %371, %v326
      %v373 = vpop.permute.xlu0 %372
      %375 = vset.pattern.permute.xlu0 1
      %376 = vperm.xlu0 %375, %v327
      %v377 = vpop.permute.xlu0 %376
      %379 = vset.pattern.permute.xlu0 1
      %380 = vperm.xlu0 %379, %v328
      %v381 = vpop.permute.xlu0 %380
      %383 = vset.pattern.permute.xlu0 1
      %384 = vperm.xlu0 %383, %v329
      %v385 = vpop.permute.xlu0 %384
      %387 = vset.pattern.permute.xlu0 1
      %388 = vperm.xlu0 %387, %v330
      %v389 = vpop.permute.xlu0 %388
      %v391 = vlaneseq
      %v392 = vshrl.u32 %v391, 7
      %v393 = vsub.s32 1, %v392
      %v394 = vrot.slane %v325, %v393
      %v395 = vsub.f32 %v373, %v394
      %v396 = vsub.f32 %v377, %v394
      %v397 = vsub.f32 %v381, %v394
      %v398 = vsub.f32 %v385, %v394
      %v399 = vsub.f32 %v389, %v394
      %v400 = vmul.f32 %v395, %v395
      %v401 = vmul.f32 %v396, %v396
      %v402 = vmul.f32 %v397, %v397
      %v403 = vmul.f32 %v398, %v398
      %v404 = vmul.f32 %v399, %v399
      %v405 = vadd.f32 %v366, %v400
      %v406 = vadd.f32 %v367, %v401
      %v407 = vadd.f32 %v368, %v402
      %v408 = vadd.f32 %v369, %v403
      %v409 = vadd.f32 %v370, %v404
      %410 = vset.pattern.permute.xlu0 2
      %411 = vperm.xlu0 %410, %v326
      %v412 = vpop.permute.xlu0 %411
      %414 = vset.pattern.permute.xlu0 2
      %415 = vperm.xlu0 %414, %v327
      %v416 = vpop.permute.xlu0 %415
      %418 = vset.pattern.permute.xlu0 2
      %419 = vperm.xlu0 %418, %v328
      %v420 = vpop.permute.xlu0 %419
      %422 = vset.pattern.permute.xlu0 2
      %423 = vperm.xlu0 %422, %v329
      %v424 = vpop.permute.xlu0 %423
      %426 = vset.pattern.permute.xlu0 2
      %427 = vperm.xlu0 %426, %v330
      %v428 = vpop.permute.xlu0 %427
      %v430 = vlaneseq
      %v431 = vshrl.u32 %v430, 7
      %v432 = vsub.s32 2, %v431
      %v433 = vrot.slane %v325, %v432
      %v434 = vsub.f32 %v412, %v433
      %v435 = vsub.f32 %v416, %v433
      %v436 = vsub.f32 %v420, %v433
      %v437 = vsub.f32 %v424, %v433
      %v438 = vsub.f32 %v428, %v433
      %v439 = vmul.f32 %v434, %v434
      %v440 = vmul.f32 %v435, %v435
      %v441 = vmul.f32 %v436, %v436
      %v442 = vmul.f32 %v437, %v437
      %v443 = vmul.f32 %v438, %v438
      %v444 = vadd.f32 %v405, %v439
      %v445 = vadd.f32 %v406, %v440
      %v446 = vadd.f32 %v407, %v441
      %v447 = vadd.f32 %v408, %v442
      %v448 = vadd.f32 %v409, %v443
      %vm449 = vcmask 523264
      %v450 = vsel %vm449, %v444, inf
      %v451 = vsel %vm449, %v445, inf
      %v452 = vsel %vm449, %v446, inf
      %v453 = vsel %vm449, %v447, inf
      %v454 = vsel %vm449, %v448, inf
      %v455 = vmin.f32 %v450, %v454
      %v456 = vmin.f32 %v455, %v451
      %v457 = vmin.f32 %v452, %v453
      %v458 = vmin.f32 %v456, %v457
      %v459 = vrot.slane %v458, 4
      %v460 = vmin.f32 %v458, %v459
      %v461 = vrot.slane %v460, 2
      %v462 = vmin.f32 %v460, %v461
      %v463 = vrot.slane %v462, 1
      %v464 = vmin.f32 %v462, %v463
      %465 = vmin.xlane.f32.xlu0 %v450
      %v466 = vpop.xlane.xlu0 %465
      %467 = vmin.xlane.f32.xlu0 %v451
      %v468 = vpop.xlane.xlu0 %467
      %469 = vmin.xlane.f32.xlu0 %v452
      %v470 = vpop.xlane.xlu0 %469
      %471 = vmin.xlane.f32.xlu0 %v453
      %v472 = vpop.xlane.xlu0 %471
      %473 = vmin.xlane.f32.xlu0 %v454
      %v474 = vpop.xlane.xlu0 %473
      %v475 = vrsqrt.pop %v464
      %v476 = vmul.f32 %v464, %v475
      %vm477 = vcmp.eq.f32.partialorder %v464, inf
      %v478 = vsel %vm477, %v464, %v476
      %vm479 = vcmp.eq.f32.partialorder %v464, 0.0
      %v480 = vand.u32 %v464, 2147483648
      %v481 = vsel %vm479, %v480, %v478
      %v482 = vsel %vm449, %v481, 0.0
      %483 = vadd.xlane.f32.xlu0 %v482
      %v484 = vpop.xlane.xlu0 %483
      %v485 = vrsqrt.pop %v466
      %v486 = vmul.f32 %v466, %v485
      %vm487 = vcmp.eq.f32.partialorder %v466, inf
      %v488 = vsel %vm487, %v466, %v486
      %vm489 = vcmp.eq.f32.partialorder %v466, 0.0
      %v490 = vand.u32 %v466, 2147483648
      %v491 = vsel %vm489, %v490, %v488
      %v492 = vrsqrt.pop %v468
      %v493 = vmul.f32 %v468, %v492
      %vm494 = vcmp.eq.f32.partialorder %v468, inf
      %v495 = vsel %vm494, %v468, %v493
      %vm496 = vcmp.eq.f32.partialorder %v468, 0.0
      %v497 = vand.u32 %v468, 2147483648
      %v498 = vsel %vm496, %v497, %v495
      %v499 = vrsqrt.pop %v470
      %v500 = vmul.f32 %v470, %v499
      %vm501 = vcmp.eq.f32.partialorder %v470, inf
      %v502 = vsel %vm501, %v470, %v500
      %vm503 = vcmp.eq.f32.partialorder %v470, 0.0
      %v504 = vand.u32 %v470, 2147483648
      %v505 = vsel %vm503, %v504, %v502
      %v506 = vrsqrt.pop %v472
      %v507 = vmul.f32 %v472, %v506
      %vm508 = vcmp.eq.f32.partialorder %v472, inf
      %v509 = vsel %vm508, %v472, %v507
      %vm510 = vcmp.eq.f32.partialorder %v472, 0.0
      %v511 = vand.u32 %v472, 2147483648
      %v512 = vsel %vm510, %v511, %v509
      %v513 = vrsqrt.pop %v474
      %v514 = vmul.f32 %v474, %v513
      %vm515 = vcmp.eq.f32.partialorder %v474, inf
      %v516 = vsel %vm515, %v474, %v514
      %vm517 = vcmp.eq.f32.partialorder %v474, 0.0
      %v518 = vand.u32 %v474, 2147483648
      %v519 = vsel %vm517, %v518, %v516
      %v520 = vadd.f32 %v491, %v498
      %v521 = vadd.f32 %v520, %v505
      %v522 = vadd.f32 %v521, %v512
      %v523 = vadd.f32 %v522, %v519
      %v524 = vrot.slane %v523, 4
      %v525 = vadd.f32 %v523, %v524
      %v526 = vrot.slane %v525, 2
      %v527 = vadd.f32 %v525, %v526
      %v528 = vrot.slane %v527, 1
      %v529 = vadd.f32 %v527, %v528
      %v530 = vadd.f32 %v484, %v529
      %vm531 = vcmask 0
      %532 = vst.msk [vmem:[%s321] sm:$0x1] %vm531, %v530
      %v533 = vlaneseq
      %v534 = vshrl.u32 %v533, 7
      %v535 = vsub.s32 0, %v534
      %v536 = vrot.slane %v331, %v535
      %v537 = vsub.f32 %v335, %v536
      %v538 = vsub.f32 %v340, %v536
      %v539 = vsub.f32 %v345, %v536
      %v540 = vsub.f32 %v350, %v536
      %v541 = vsub.f32 %v355, %v536
      %v542 = vmul.f32 %v537, %v537
      %v543 = vmul.f32 %v538, %v538
      %v544 = vmul.f32 %v539, %v539
      %v545 = vmul.f32 %v540, %v540
      %v546 = vmul.f32 %v541, %v541
      %v547 = vlaneseq
      %v548 = vshrl.u32 %v547, 7
      %v549 = vsub.s32 1, %v548
      %v550 = vrot.slane %v331, %v549
      %v551 = vsub.f32 %v373, %v550
      %v552 = vsub.f32 %v377, %v550
      %v553 = vsub.f32 %v381, %v550
      %v554 = vsub.f32 %v385, %v550
      %v555 = vsub.f32 %v389, %v550
      %v556 = vmul.f32 %v551, %v551
      %v557 = vmul.f32 %v552, %v552
      %v558 = vmul.f32 %v553, %v553
      %v559 = vmul.f32 %v554, %v554
      %v560 = vmul.f32 %v555, %v555
      %v561 = vadd.f32 %v542, %v556
      %v562 = vadd.f32 %v543, %v557
      %v563 = vadd.f32 %v544, %v558
      %v564 = vadd.f32 %v545, %v559
      %v565 = vadd.f32 %v546, %v560
      %v566 = vlaneseq
      %v567 = vshrl.u32 %v566, 7
      %v568 = vsub.s32 2, %v567
      %v569 = vrot.slane %v331, %v568
      %v570 = vsub.f32 %v412, %v569
      %v571 = vsub.f32 %v416, %v569
      %v572 = vsub.f32 %v420, %v569
      %v573 = vsub.f32 %v424, %v569
      %v574 = vsub.f32 %v428, %v569
      %v575 = vmul.f32 %v570, %v570
      %v576 = vmul.f32 %v571, %v571
      %v577 = vmul.f32 %v572, %v572
      %v578 = vmul.f32 %v573, %v573
      %v579 = vmul.f32 %v574, %v574
      %v580 = vadd.f32 %v561, %v575
      %v581 = vadd.f32 %v562, %v576
      %v582 = vadd.f32 %v563, %v577
      %v583 = vadd.f32 %v564, %v578
      %v584 = vadd.f32 %v565, %v579
      %v585 = vld [vmem:[%s315] sm:$0xff]
      %v586 = vld [vmem:[%s315 + $0x8] sm:$0xff]
      %v587 = vld [vmem:[%s315 + $0x10] sm:$0xff]
      %v588 = vld [vmem:[%s315 + $0x18] sm:$0xff]
      %v589 = vld [vmem:[%s315 + $0x20] sm:$0xff]
      %vm590 = vcmp.gt.f32.partialorder %v585, 0.5
      %vm591 = vcmp.gt.f32.partialorder %v586, 0.5
      %vm592 = vcmp.gt.f32.partialorder %v587, 0.5
      %vm593 = vcmp.gt.f32.partialorder %v588, 0.5
      %vm594 = vcmp.gt.f32.partialorder %v589, 0.5
      %v595 = vsel %vm590, %v580, 1e+30
      %v596 = vsel %vm591, %v581, 1e+30
      %v597 = vsel %vm592, %v582, 1e+30
      %v598 = vsel %vm593, %v583, 1e+30
      %v599 = vsel %vm594, %v584, 1e+30
      %vm600 = vcmask 326656
      %v601 = vsel %vm600, %v595, inf
      %v602 = vsel %vm600, %v596, inf
      %v603 = vsel %vm600, %v597, inf
      %v604 = vsel %vm600, %v598, inf
      %v605 = vsel %vm600, %v599, inf
      %v606 = vmin.f32 %v601, %v605
      %v607 = vmin.f32 %v606, %v602
      %v608 = vmin.f32 %v603, %v604
      %v609 = vmin.f32 %v607, %v608
      %v610 = vrot.slane %v609, 4
      %v611 = vmin.f32 %v609, %v610
      %v612 = vrot.slane %v611, 2
      %v613 = vmin.f32 %v611, %v612
      %v614 = vrot.slane %v613, 1
      %v615 = vmin.f32 %v613, %v614
      %v616 = vmin.f32 %v615, 100000.0
      %v617 = vld [vmem:[%s318] sm:$0x1]
      %v618 = vmul.f32 %v616, %v617
      %vm619 = vcmask 319488
      %v620 = vsel %vm619, %v618, 0.0
      %621 = vadd.xlane.f32.xlu0 %v620
      %v622 = vpop.xlane.xlu0 %621
      %623 = vst.msk [vmem:[%s324] sm:$0x1] %vm531, %v622
      %p624 = scmp.lt.s32.totalorder %s18, 1
      %s625 = scalar_select %p624, %s18, 1
      %s626 = scalar_lea.vmem %s5, %s625
      %p627 = scmp.lt.s32.totalorder %s18, 1
      %s628 = scalar_select %p627, %s18, 1
      %s629 = scalar_lea.vmem %s6, %s628
      // Predicated region
      $region41: #{tpu_custom_call.1} parent=39 // pred_check
        %p630 = pneg %p166
      $region42: #{tpu_custom_call.1} parent=39 // pred_check_branch
        %632 = sbr.rel (%p630) target = $region44
      $region43: #{tpu_custom_call.1} parent=39 // pred_region
        _
      $region44: #{tpu_custom_call.1} parent=39 // pred_fallthru
        _
      // Predicated region
      $region45: #{tpu_custom_call.1} parent=39 // pred_check
        %p633 = pneg %p192
      $region46: #{tpu_custom_call.1} parent=39 // pred_check_branch
        %635 = sbr.rel (%p633) target = $region48
      $region47: #{tpu_custom_call.1} parent=39 // pred_region
        _
      $region48: #{tpu_custom_call.1} parent=39 // pred_fallthru
        _
    $region40: #{tpu_custom_call.1} parent=5 // pred_fallthru
      _
    %p636 = scmp.le.s32.totalorder 2, %s13
    // Predicated region
    $region49: #{tpu_custom_call.1} parent=5 // pred_check
      %p637 = pneg %p636
    $region50: #{tpu_custom_call.1} parent=5 // pred_check_branch
      %639 = sbr.rel (%p637) target = $region52
    $region51: #{tpu_custom_call.1} parent=5 // pred_region
      %s640 = ssub.s32 %s13, 2
      // Predicated region
      $region53: #{tpu_custom_call.1} parent=51 // pred_check
        %p641 = pneg %p172
      $region54: #{tpu_custom_call.1} parent=51 // pred_check_branch
        %643 = sbr.rel (%p641) target = $region56
      $region55: #{tpu_custom_call.1} parent=51 // pred_region
        %p644 = scmp.lt.s32.totalorder %s19, 1
        %s645 = scalar_select %p644, %s19, 1
        %s646 = scalar_lea.vmem %s5, %s645
      $region56: #{tpu_custom_call.1} parent=51 // pred_fallthru
        _
      // Predicated region
      $region57: #{tpu_custom_call.1} parent=51 // pred_check
        %p647 = pneg %p198
      $region58: #{tpu_custom_call.1} parent=51 // pred_check_branch
        %649 = sbr.rel (%p647) target = $region60
      $region59: #{tpu_custom_call.1} parent=51 // pred_region
        %p650 = scmp.lt.s32.totalorder %s19, 1
        %s651 = scalar_select %p650, %s19, 1
        %s652 = scalar_lea.vmem %s6, %s651
      $region60: #{tpu_custom_call.1} parent=51 // pred_fallthru
        _
    $region52: #{tpu_custom_call.1} parent=5 // pred_fallthru
      _
  $region6: #{tpu_custom_call.1} parent=0 // loop_footer
    %s17 = sadd.s32 1, %s13
  $region7: #{tpu_custom_call.1} parent=0 // loop_footer_branch
    %12 = sbr.rel target = $region3
  $region8: #{tpu_custom_call.1} parent=0 // loop_exit
    _

</llo_original>
